<compile_context>
chip_gen: v6e
topology: v6e:2x2x1
jax: 0.10.0
libtpu: 0.0.40
codegen_flags: <defaults>
</compile_context>

<pallas_src>
import functools

import jax
import jax.numpy as jnp
from jax.experimental import pallas as pl
from jax.experimental.pallas import tpu as pltpu


def _round_up(x: int, n: int) -> int:
    return ((x + n - 1) // n) * n


def _cdiv(a: int, b: int) -> int:
    return (a + b - 1) // b


def _vmem_budget_bytes() -> int:
    """Generation-aware VMEM budget: ~75% of per-TC capacity, capped at 100 MiB."""
    cap = None
    try:
        if hasattr(pltpu, "get_tpu_info"):
            cap = getattr(pltpu.get_tpu_info(), "vmem_capacity_bytes", None)
    except Exception:
        cap = None
    if not cap:
        cap = 64 * 1024 * 1024          # conservative default (v7x per-TC)
    return min((cap * 3) // 4, 100 * 1024 * 1024)


def _make_emb_spec(v_pad: int, d: int):
    """Resident (Vpad, D) table spec: constant index map, single-buffered."""
    idx = lambda i: (0, 0)
    if hasattr(pl, "Buffered"):
        try:
            return pl.BlockSpec((v_pad, d), idx, pipeline_mode=pl.Buffered(1)), 1
        except Exception:
            pass
    return pl.BlockSpec((v_pad, d), idx), 2


def _choose_tile_m(m, d, v_pad, x_item, emb_item, out_item, budget, emb_bufs):
    feasible = 8
    for tm in (512, 256, 128, 64, 32, 16, 8):
        need = (2 * tm * d * x_item                 # double-buffered x tile
                + emb_bufs * v_pad * d * emb_item   # resident embedding table
                + 2 * tm * v_pad * out_item         # double-buffered out tile
                + tm * v_pad * 4)                   # f32 epilogue intermediate
        if need <= budget:
            feasible = tm
            break
    # Rebalance so the last tile is nearly full: padded rows are full-price
    # MXU flops, exp work and HBM output writes.
    n_tiles = max(1, _cdiv(m, feasible))
    return max(8, min(feasible, _round_up(_cdiv(m, n_tiles), 8)))


def _row_chunk(tile_m: int) -> int:
    """Row-chunk size for the softmax path (MXU / EUP-epilogue overlap)."""
    for c in (256, 128):
        if tile_m % c == 0 and tile_m > c:
            return c
    return tile_m


def _predictor_kernel(x_ref, emb_ref, o_ref, *, output_logits: bool,
                      valid_v: int, row_chunk: int):
    # x_ref:   (TM, D)   tile of flattened output embeddings (native dtype)
    # emb_ref: (Vp, D)   lane-padded embedding table, natural layout (resident)
    # o_ref:   (TM, Vp)  logits or probabilities
    dn = (((1,), (1,)), ((), ()))       # contract last dims: x @ emb^T on the MXU
    emb = emb_ref[...]
    tm, vp = o_ref.shape

    if output_logits:
        o_ref[...] = jax.lax.dot_general(
            x_ref[...], emb, dn,
            preferred_element_type=jnp.float32).astype(o_ref.dtype)
        return

    # Single (1, Vp) additive -inf bias row masks vocab padding out of the
    # softmax (no per-step (TM, Vp) iota / select).
    if valid_v != vp:
        lane = jax.lax.broadcasted_iota(jnp.int32, (1, vp), 1)
        bias = jnp.where(lane < valid_v, 0.0, -jnp.inf).astype(jnp.float32)
    else:
        bias = None

    def softmax_rows(x_chunk):
        logits = jax.lax.dot_general(
            x_chunk, emb, dn, preferred_element_type=jnp.float32)
        if bias is not None:
            logits = logits + bias
        row_max = jnp.max(logits, axis=-1, keepdims=True)
        e = jnp.exp(logits - row_max)
        denom = jnp.sum(e, axis=-1, keepdims=True)
        # Exact divide: rows sum to 1 to f32 rounding (approx reciprocal
        # previously broke the sum-to-one check).
        return e / denom

    n_chunks = tm // row_chunk
    if n_chunks <= 1:
        o_ref[...] = softmax_rows(x_ref[...]).astype(o_ref.dtype)
    else:
        # Chunked epilogue: the MXU matmul of chunk k+1 overlaps the
        # exp-heavy VPU/EUP epilogue of chunk k.
        def body(c, carry):
            r0 = pl.multiple_of(c * row_chunk, row_chunk)
            xc = x_ref[pl.ds(r0, row_chunk), :]
            o_ref[pl.ds(r0, row_chunk), :] = softmax_rows(xc).astype(o_ref.dtype)
            return carry
        jax.lax.fori_loop(0, n_chunks, body, 0, unroll=True)


def output_predictor(output_embeddings: jax.Array,
                     embeddings: jax.Array,
                     output_logits: bool = False,
                     *,
                     tile_m: int | None = None,
                     cast_to_bf16: bool = False) -> jax.Array:
    """output_embeddings: [*, D]; embeddings: [V, D]; returns [*, V]."""
    *lead, d = output_embeddings.shape
    v, d2 = embeddings.shape
    assert d == d2, "model_size mismatch"

    out_dtype = output_embeddings.dtype
    x = output_embeddings.reshape(-1, d)
    m = x.shape[0]

    # Lane-dense vocab output: pad V to a multiple of 128 with zero rows.
    # No transpose -- the kernel contracts on the last dims directly.
    v_pad = _round_up(v, 128)
    emb = embeddings
    if v_pad != v:
        emb = jnp.pad(emb, ((0, v_pad - v), (0, 0)))

    if cast_to_bf16 and x.dtype == jnp.float32:
        # bf16 operands, f32 accumulation: MXU-native dtype, halves DMA bytes.
        x = x.astype(jnp.bfloat16)
        emb = emb.astype(jnp.bfloat16)

    emb_spec, emb_bufs = _make_emb_spec(v_pad, d)
    budget = _vmem_budget_bytes()

    if tile_m is None:
        tile_m = _choose_tile_m(
            m, d, v_pad, x.dtype.itemsize, emb.dtype.itemsize,
            jnp.dtype(out_dtype).itemsize, budget, emb_bufs)

    m_pad = _round_up(m, tile_m)
    if m_pad != m:
        x = jnp.pad(x, ((0, m_pad - m), (0, 0)))

    kernel = functools.partial(
        _predictor_kernel, output_logits=output_logits, valid_v=v,
        row_chunk=_row_chunk(tile_m))

    flops = 2 * m_pad * v_pad * d
    transcendentals = 0 if output_logits else m_pad * v_pad
    bytes_accessed = (x.size * x.dtype.itemsize
                      + emb.size * emb.dtype.itemsize
                      + m_pad * v_pad * jnp.dtype(out_dtype).itemsize)

    out = pl.pallas_call(
        kernel,
        out_shape=jax.ShapeDtypeStruct((m_pad, v_pad), out_dtype),
        grid_spec=pltpu.PrefetchScalarGridSpec(
            num_scalar_prefetch=0,
            grid=(m_pad // tile_m,),
            in_specs=[
                pl.BlockSpec((tile_m, d), lambda i: (i, 0)),   # x tile
                emb_spec,                                       # resident (Vp, D)
            ],
            out_specs=pl.BlockSpec((tile_m, v_pad), lambda i: (i, 0)),
        ),
        compiler_params=pltpu.CompilerParams(
            dimension_semantics=("parallel",),
            vmem_limit_bytes=budget,
        ),
        cost_estimate=pl.CostEstimate(
            flops=flops,
            transcendentals=transcendentals,
            bytes_accessed=bytes_accessed),
    )(x, emb)

    if m_pad != m or v_pad != v:
        out = out[:m, :v]
    return out.reshape(*lead, v)


if __name__ == "__main__":
    key = jax.random.PRNGKey(0)
    k1, k2, k3, k4, k5, k6 = jax.random.split(key, 6)

    def check(x, emb, *, tile_m=None):
        probs = output_predictor(x, emb, output_logits=False, tile_m=tile_m)
        logits = output_predictor(x, emb, output_logits=True, tile_m=tile_m)
        jax.block_until_ready((probs, logits))
        ref_logits = x @ emb.T
        ref_probs = jax.nn.softmax(ref_logits, axis=-1)
        v = emb.shape[0]
        assert logits.shape == x.shape[:-1] + (v,)
        assert probs.shape == x.shape[:-1] + (v,)
        assert jnp.allclose(logits, ref_logits, atol=2e-3, rtol=2e-3)
        assert jnp.allclose(probs, ref_probs, atol=1e-4, rtol=1e-2)
        assert jnp.allclose(jnp.sum(probs, axis=-1), 1.0, atol=1e-3)

    # Case 1: lane-aligned vocab (no padding anywhere), single tile.
    emb1 = jax.random.normal(k1, (128, 32), dtype=jnp.float32) * 0.02
    x1 = jax.random.normal(k2, (2, 8, 32), dtype=jnp.float32)
    check(x1, emb1)

    # Case 2: unaligned M (=15) and vocab (<128); forced small tile so the
    # grid has several steps and the padded-row / masked-softmax paths run.
    emb2 = jax.random.normal(k3, (100, 32), dtype=jnp.float32) * 0.02
    x2 = jax.random.normal(k4, (3, 5, 32), dtype=jnp.float32)
    check(x2, emb2, tile_m=8)

    # Case 3: larger M so the chunked (MXU/EUP-overlapped) softmax epilogue
    # path is exercised (tile_m=512 -> two 256-row chunks).
    emb3 = jax.random.normal(k5, (256, 32), dtype=jnp.float32) * 0.02
    x3 = jax.random.normal(k6, (4, 128, 32), dtype=jnp.float32)
    check(x3, emb3)

    print("KERNEL_OK")
</pallas_src>

<mosaic_0001>
module attributes {stable_mosaic.version = 11 : i64} {
  func.func @_predictor_kernel(%arg0: i32, %arg1: memref<16x32xf32, #tpu.memory_space<vmem>>, %arg2: memref<128x32xf32, #tpu.memory_space<vmem>>, %arg3: memref<16x128xf32, #tpu.memory_space<vmem>>) attributes {dimension_semantics = [#tpu.dimension_semantics<parallel>], iteration_bounds = array<i64: 1>, scalar_prefetch = 0 : i64, scratch_operands = 0 : i64, tpu.core_type = #tpu.core_type<tc>, window_params = [{transform_indices = @transform_0, window_bounds = array<i64: 16, 32>}, {pipeline_mode = #tpu.pipeline_mode<synchronous>, transform_indices = @transform_1, window_bounds = array<i64: 128, 32>}, {transform_indices = @transform_2, window_bounds = array<i64: 16, 128>}]} {
    %c0 = arith.constant 0 : index
    %c0_0 = arith.constant 0 : index
    %0 = vector.load %arg2[%c0, %c0_0] : memref<128x32xf32, #tpu.memory_space<vmem>>, vector<128x32xf32>
    %c0_1 = arith.constant 0 : index
    %c0_2 = arith.constant 0 : index
    %1 = vector.load %arg1[%c0_1, %c0_2] : memref<16x32xf32, #tpu.memory_space<vmem>>, vector<16x32xf32>
    %cst = arith.constant dense<0.000000e+00> : vector<16x128xf32>
    %2 = tpu.matmul %1, %0, %cst {dimension_numbers = #tpu.dot_dimension_numbers<[1], [1], [0], [0], [0, 0, 1, 0], [], []>} : vector<16x32xf32>, vector<128x32xf32>, vector<16x128xf32> -> vector<16x128xf32>
    %cst_3 = arith.constant dense<0xFF800000> : vector<16xf32>
    %3 = vector.multi_reduction <maximumf>, %2, %cst_3 [1] : vector<16x128xf32> to vector<16xf32>
    %4 = vector.shape_cast %3 : vector<16xf32> to vector<16x1xf32>
    %5 = vector.broadcast %4 : vector<16x1xf32> to vector<16x128xf32>
    %6 = arith.subf %2, %5 : vector<16x128xf32>
    %7 = math.exp %6 : vector<16x128xf32>
    %cst_4 = arith.constant dense<0.000000e+00> : vector<16xf32>
    %8 = vector.multi_reduction <add>, %7, %cst_4 [1] : vector<16x128xf32> to vector<16xf32>
    %9 = vector.shape_cast %8 : vector<16xf32> to vector<16x1xf32>
    %10 = vector.broadcast %9 : vector<16x1xf32> to vector<16x128xf32>
    %11 = arith.divf %7, %10 : vector<16x128xf32>
    %c0_5 = arith.constant 0 : index
    %c0_6 = arith.constant 0 : index
    %12 = vector.load %arg3[%c0_5, %c0_6] : memref<16x128xf32, #tpu.memory_space<vmem>>, vector<16x128xf32>
    tpu.vector_store %arg3[%c0_5, %c0_6], %11 {strides = array<i32>} : memref<16x128xf32, #tpu.memory_space<vmem>>, vector<16x128xf32>,
    return
  }
  func.func @transform_0(%arg0: i32) -> (i32, i32) {
    %c0_i32 = arith.constant 0 : i32
    %c0_i32_0 = arith.constant 0 : i32
    return %arg0, %c0_i32 : i32, i32
  }
  func.func @transform_1(%arg0: i32) -> (i32, i32) {
    %c0_i32 = arith.constant 0 : i32
    %c0_i32_0 = arith.constant 0 : i32
    %c0_i32_1 = arith.constant 0 : i32
    return %c0_i32, %c0_i32_0 : i32, i32
  }
  func.func @transform_2(%arg0: i32) -> (i32, i32) {
    %c0_i32 = arith.constant 0 : i32
    %c0_i32_0 = arith.constant 0 : i32
    return %arg0, %c0_i32 : i32, i32
  }
}

</mosaic_0001>

<llo_original>
// kernel: tpu_custom_call.1
$region0: #{tpu_custom_call.1}
  #allocation0 [shape = 'u32[]', space=smem, size = 0x4, offset = 0x4, fixed_abs, tag = 'smem constant byte address 0x4 - core index']
  #allocation1 [shape = 'u32[144,128]{1,0:T(1,128)}', space=vmem, size = 0x12000, scoped, tag = 'internal scratch']
  %s0 = inlined_call_operand.vmem [shape: f32[16,32], index: 0, kind: input, shape index: {}]
  %s1 = inlined_call_operand.vmem [shape: f32[128,32], index: 1, kind: input, shape index: {}]
  %s2 = inlined_call_operand.hbm [shape: f32[16,128], index: 2, kind: output, shape index: {}]
  %s3 = sld [smem:[#allocation0]]
  $region18: #{tpu_custom_call.1} parent=0
    _
  %s5 = ssub.s32 1, %s3
  %s6 = scalar_select 0, %s5, %s3
  $region1: #{tpu_custom_call.1} parent=0
    #allocation2 [shape = 'u8[8192]{0}', space=vmem, size = 0x2000, scoped, tag = 'output window, operand 0, single buffered']
    #allocation3 [shape = 's32[1]{0}', space=sflag, size = 0x4, scoped, tag = 'scoped memory for tpu_custom_call.1']
    %7 = vsyncpa [#allocation3], 0
    // Predicated region
    $region2: #{tpu_custom_call.1} parent=1 // pred_check
      _
    $region3: #{tpu_custom_call.1} parent=1 // pred_check_branch
      %9 = sbr.rel (0) target = $region5
    $region4: #{tpu_custom_call.1} parent=1 // pred_region
      _
    $region5: #{tpu_custom_call.1} parent=1 // pred_fallthru
      _
    // Predicated region
    $region6: #{tpu_custom_call.1} parent=1 // pred_check
      _
    $region7: #{tpu_custom_call.1} parent=1 // pred_check_branch
      %11 = sbr.rel (0) target = $region9
    $region8: #{tpu_custom_call.1} parent=1 // pred_region
      _
    $region9: #{tpu_custom_call.1} parent=1 // pred_fallthru
      _
    %v12 = vld [vmem:[%s1] sm:$0xff]
    %v13 = vld [vmem:[%s1 + $0x8] sm:$0xff]
    %v14 = vld [vmem:[%s1 + $0x10] sm:$0xff]
    %v15 = vld [vmem:[%s1 + $0x18] sm:$0xff]
    %v16 = vld [vmem:[%s1 + $0x20] sm:$0xff]
    %v17 = vld [vmem:[%s1 + $0x28] sm:$0xff]
    %v18 = vld [vmem:[%s1 + $0x30] sm:$0xff]
    %v19 = vld [vmem:[%s1 + $0x38] sm:$0xff]
    %v20 = vld [vmem:[%s1 + $0x40] sm:$0xff]
    %v21 = vld [vmem:[%s1 + $0x48] sm:$0xff]
    %v22 = vld [vmem:[%s1 + $0x50] sm:$0xff]
    %v23 = vld [vmem:[%s1 + $0x58] sm:$0xff]
    %v24 = vld [vmem:[%s1 + $0x60] sm:$0xff]
    %v25 = vld [vmem:[%s1 + $0x68] sm:$0xff]
    %v26 = vld [vmem:[%s1 + $0x70] sm:$0xff]
    %v27 = vld [vmem:[%s1 + $0x78] sm:$0xff]
    %v28 = vld [vmem:[%s0] sm:$0xff]
    %v29 = vld [vmem:[%s0 + $0x8] sm:$0xff]
    %vm30 = vcmask 261120
    %v32 = vsel %vm30, %v28, 0
    %v35 = vsel %vm30, %v29, 0
    %v38 = vsel %vm30, %v12, 0
    %v41 = vsel %vm30, %v13, 0
    %v44 = vsel %vm30, %v14, 0
    %v47 = vsel %vm30, %v15, 0
    %v50 = vsel %vm30, %v16, 0
    %v53 = vsel %vm30, %v17, 0
    %v56 = vsel %vm30, %v18, 0
    %v59 = vsel %vm30, %v19, 0
    %v62 = vsel %vm30, %v20, 0
    %v65 = vsel %vm30, %v21, 0
    %v68 = vsel %vm30, %v22, 0
    %v71 = vsel %vm30, %v23, 0
    %v74 = vsel %vm30, %v24, 0
    %v77 = vsel %vm30, %v25, 0
    %v80 = vsel %vm30, %v26, 0
    %v83 = vsel %vm30, %v27, 0
    %85 = vmatprep.subr.mxu0 0.0
    %86 = vmatpush1.xpose.msra.mxu0 %v83
    %87 = vmatprep.subr.mxu0 0.0
    %88 = vmatpush1.xpose.msra.mxu0 %v80
    %89 = vmatprep.subr.mxu0 0.0
    %90 = vmatpush1.xpose.msra.mxu0 %v77
    %91 = vmatprep.subr.mxu0 0.0
    %92 = vmatpush1.xpose.msra.mxu0 %v74
    %93 = vmatprep.subr.mxu0 0.0
    %94 = vmatpush1.xpose.msra.mxu0 %v71
    %95 = vmatprep.subr.mxu0 0.0
    %96 = vmatpush1.xpose.msra.mxu0 %v68
    %97 = vmatprep.subr.mxu0 0.0
    %98 = vmatpush1.xpose.msra.mxu0 %v65
    %99 = vmatprep.subr.mxu0 0.0
    %100 = vmatpush1.xpose.msra.mxu0 %v62
    %101 = vmatprep.subr.mxu0 0.0
    %102 = vmatpush1.xpose.msra.mxu0 %v59
    %103 = vmatprep.subr.mxu0 0.0
    %104 = vmatpush1.xpose.msra.mxu0 %v56
    %105 = vmatprep.subr.mxu0 0.0
    %106 = vmatpush1.xpose.msra.mxu0 %v53
    %107 = vmatprep.subr.mxu0 0.0
    %108 = vmatpush1.xpose.msra.mxu0 %v50
    %109 = vmatprep.subr.mxu0 0.0
    %110 = vmatpush1.xpose.msra.mxu0 %v47
    %111 = vmatprep.subr.mxu0 0.0
    %112 = vmatpush1.xpose.msra.mxu0 %v44
    %113 = vmatprep.subr.mxu0 0.0
    %114 = vmatpush1.xpose.msra.mxu0 %v41
    %115 = vmatprep.subr.mxu0 0.0
    %116 = vmatpush1.xpose.msra.mxu0 %v38
    %117 = vmatprep.subr.mxu0 0.0
    %118 = vmatpush2.xpose.msra.mxu0 0.0
    %119 = vmatprep.subr.mxu0 0.0
    %120 = vmatpush2.xpose.msra.mxu0 0.0
    %121 = vmatprep.subr.mxu0 0.0
    %122 = vmatpush2.xpose.msra.mxu0 0.0
    %123 = vmatprep.subr.mxu0 0.0
    %124 = vmatpush2.xpose.msra.mxu0 0.0
    %125 = vmatprep.subr.mxu0 0.0
    %126 = vmatpush2.xpose.msra.mxu0 0.0
    %127 = vmatprep.subr.mxu0 0.0
    %128 = vmatpush2.xpose.msra.mxu0 0.0
    %129 = vmatprep.subr.mxu0 0.0
    %130 = vmatpush2.xpose.msra.mxu0 0.0
    %131 = vmatprep.subr.mxu0 0.0
    %132 = vmatpush2.xpose.msra.mxu0 0.0
    %133 = vmatprep.subr.mxu0 0.0
    %134 = vmatpush2.xpose.msra.mxu0 0.0
    %135 = vmatprep.subr.mxu0 0.0
    %136 = vmatpush2.xpose.msra.mxu0 0.0
    %137 = vmatprep.subr.mxu0 0.0
    %138 = vmatpush2.xpose.msra.mxu0 0.0
    %139 = vmatprep.subr.mxu0 0.0
    %140 = vmatpush2.xpose.msra.mxu0 0.0
    %141 = vmatprep.subr.mxu0 0.0
    %142 = vmatpush2.xpose.msra.mxu0 0.0
    %143 = vmatprep.subr.mxu0 0.0
    %144 = vmatpush2.xpose.msra.mxu0 0.0
    %145 = vmatprep.subr.mxu0 0.0
    %146 = vmatpush2.xpose.msra.mxu0 0.0
    %147 = vmatprep.subr.mxu0 0.0
    %148 = vmatpush2.xpose.msra.mxu0 0.0
    %149 = vmatprep.mubr.f32.mxu0 0.0
    %150 = vmatmul.mubr.f32.gmra.mxu0 %v32
    %v151 = vpop.f32.mrf.mxu0
    %v152 = vadd.f32 0.0, %v151
    %v153 = vpop.f32.mrf.mxu0
    %154 = vmatprep.mubr.f32.mxu0 0.0
    %155 = vmatmul.mubr.f32.gmra.mxu0 %v35
    %v156 = vpop.f32.mrf.mxu0
    %v157 = vadd.f32 0.0, %v156
    %v158 = vpop.f32.mrf.mxu0
    %159 = vdwg.mxu0
    %160 = vmax.xlane.f32.xlu0 %v152
    %v161 = vpop.xlane.xlu0 %160
    %162 = vmax.xlane.f32.xlu0 %v157
    %v163 = vpop.xlane.xlu0 %162
    %v164 = vsub.f32 %v152, %v161
    %v165 = vsub.f32 %v157, %v163
    %v166 = vmul.f32 %v164, 1.442695
    %v167 = vpow.pop %v166
    %v168 = vmul.f32 %v165, 1.442695
    %v169 = vpow.pop %v168
    %170 = vadd.xlane.f32.xlu0 %v167
    %v171 = vpop.xlane.xlu0 %170
    %172 = vadd.xlane.f32.xlu0 %v169
    %v173 = vpop.xlane.xlu0 %172
    %v174 = vrcp.pop %v171
    %v175 = vmul.f32 %v167, %v174
    %v176 = vrcp.pop %v173
    %v177 = vmul.f32 %v169, %v176
    %178 = vst [vmem:[#allocation2] sm:$0xff] %v175
    %179 = vst [vmem:[#allocation2 + $0x8] sm:$0xff] %v177
    // Predicated region
    $region10: #{tpu_custom_call.1} parent=1 // pred_check
      _
    $region11: #{tpu_custom_call.1} parent=1 // pred_check_branch
      %181 = sbr.rel (0) target = $region13
    $region12: #{tpu_custom_call.1} parent=1 // pred_region
      %s183 = ssub.s32 256, 256
      %184 = vsyncadd [#allocation3], %s183
      %s185 = sshll.u32 [#allocation2], 4
      %s186 = int_to_ptr.vmem [resolvable:$true] %s185
      %191 = dma.vmem_to_hbm [thread:$0]  %s186, 256, %s2, [#allocation3], 128, 128, 8
    $region13: #{tpu_custom_call.1} parent=1 // pred_fallthru
      _
    // Predicated region
    $region14: #{tpu_custom_call.1} parent=1 // pred_check
      _
    $region15: #{tpu_custom_call.1} parent=1 // pred_check_branch
      %193 = sbr.rel (0) target = $region17
    $region16: #{tpu_custom_call.1} parent=1 // pred_region
      %194 = dma.done [#allocation3], 256
    $region17: #{tpu_custom_call.1} parent=1 // pred_fallthru
      _
    %195 = vsyncpa [#allocation3], 1

</llo_original>
